<compile_context>
chip_gen: v7x
topology: tpu7x:2x2x1
jax: 0.10.0
libtpu: 0.0.40
codegen_flags: <defaults>
</compile_context>

<pallas_src>
import jax
import jax.numpy as jnp
from jax.experimental import pallas as pl
from jax.experimental.pallas import tpu as pltpu


_NUM_SPLITS = 2                        # leading "parallel" grid axis (2 TCs on v7x)
_TARGET_BLOCK_BYTES = 2 * 1024 * 1024  # per-step input block (x2 buffers in flight)
_MAX_BLOCK_B = 1024                    # cap on matrices per grid step


def _tnet_loss_kernel(t_ref, o_ref):
    step = pl.program_id(1)

    # Initialize this core's accumulator block on its first reduction step.
    @pl.when(step == 0)
    def _init():
        o_ref[...] = jnp.zeros_like(o_ref)

    t = t_ref[...]  # (block_b, D, D), native dtype
    # G_b = T_b @ T_b^T for every matrix in the block, f32 accumulation on MXU.
    gram = jnp.einsum("bij,bkj->bik", t, t, preferred_element_type=jnp.float32)
    t32 = t.astype(jnp.float32)
    # sum((I - G)^2) = sum(G*G) - 2*sum(T*T) + D   (the +D term is added in the wrapper)
    partial = jnp.sum(gram * gram) - 2.0 * jnp.sum(t32 * t32)
    o_ref[...] += partial.reshape(1, 1, 1)


def tnet_loss(transforms: jax.Array) -> jax.Array:
    """Pallas implementation of TNetLoss.forward for (B, D, D) inputs."""
    if transforms.ndim != 3:
        raise ValueError("The dimension of the transform matrix is not 3!")
    if transforms.shape[1] != transforms.shape[2]:
        raise ValueError("The transform matrix must be a square matrix!")

    b, d, _ = transforms.shape
    if b == 0:
        return jnp.float32(0.0)

    itemsize = jnp.dtype(transforms.dtype).itemsize
    mat_bytes = d * d * itemsize
    block_b = max(1, min(_TARGET_BLOCK_BYTES // mat_bytes,
                         pl.cdiv(b, _NUM_SPLITS),
                         _MAX_BLOCK_B))

    # Pad the batch with zero matrices so it divides evenly; zero matrices
    # contribute 0 to sum(G*G) - 2*sum(T*T).
    chunk = _NUM_SPLITS * block_b
    b_pad = pl.cdiv(b, chunk) * chunk
    if b_pad != b:
        transforms = jnp.pad(transforms, ((0, b_pad - b), (0, 0), (0, 0)))
    steps = b_pad // chunk  # reduction steps per core

    partials = pl.pallas_call(
        _tnet_loss_kernel,
        out_shape=jax.ShapeDtypeStruct((_NUM_SPLITS, 1, 1), jnp.float32),
        grid_spec=pltpu.PrefetchScalarGridSpec(
            num_scalar_prefetch=0,
            grid=(_NUM_SPLITS, steps),
            in_specs=[pl.BlockSpec((block_b, d, d),
                                   lambda c, i: (c * steps + i, 0, 0))],
            out_specs=pl.BlockSpec((1, 1, 1), lambda c, i: (c, 0, 0)),
        ),
        compiler_params=pltpu.CompilerParams(
            dimension_semantics=("parallel", "arbitrary"),
        ),
    )(transforms)

    # Add the identity constant B*D (true batch only; padding contributes 0),
    # then apply the /2.
    return (jnp.sum(partials) + jnp.float32(b * d)) * jnp.float32(0.5)


def tnet_loss_ref(transforms: jax.Array) -> jax.Array:
    """Pure-JAX reference, mirrors the PyTorch module."""
    transforms = transforms.astype(jnp.float32)
    d = transforms.shape[1]
    eye = jnp.eye(d, dtype=jnp.float32)
    diff = eye - jnp.einsum("bij,bkj->bik", transforms, transforms)
    return jnp.sum(diff * diff) / 2.0


if __name__ == "__main__":
    key = jax.random.PRNGKey(0)
    # Small PointNet-style feature T-Net: batch of 7 (exercises tail padding),
    # 64x64 transform matrices.
    B, D = 7, 64
    x = jax.random.normal(key, (B, D, D), dtype=jnp.float32)

    loss = jax.block_until_ready(tnet_loss(x))
    ref = jax.block_until_ready(tnet_loss_ref(x))

    assert jnp.allclose(loss, ref, rtol=1e-4, atol=1e-3), (loss, ref)
    print("KERNEL_OK")
</pallas_src>

<mosaic_0001>
module attributes {stable_mosaic.version = 11 : i64} {
  func.func @_tnet_loss_kernel(%arg0: i32, %arg1: i32, %arg2: memref<4x64x64xf32, #tpu.memory_space<vmem>>, %arg3: memref<1x1x1xf32, #tpu.memory_space<vmem>>) attributes {dimension_semantics = [#tpu.dimension_semantics<parallel>, #tpu.dimension_semantics<arbitrary>], iteration_bounds = array<i64: 2, 1>, scalar_prefetch = 0 : i64, scratch_operands = 0 : i64, tpu.core_type = #tpu.core_type<tc>, window_params = [{transform_indices = @transform_0, window_bounds = array<i64: 4, 64, 64>}, {transform_indices = @transform_1, window_bounds = array<i64: 1, 1, 1>}]} {
    %c0_i32 = arith.constant 0 : i32
    %0 = arith.cmpi eq, %arg1, %c0_i32 : i32
    %1 = arith.extui %0 : i1 to i32
    %c0_i32_0 = arith.constant 0 : i32
    %2 = arith.cmpi ne, %1, %c0_i32_0 : i32
    scf.if %2 {
      %cst_12 = arith.constant 0.000000e+00 : f32
      %21 = vector.broadcast %cst_12 : f32 to vector<1x1x1xf32>
      %c0_13 = arith.constant 0 : index
      %c0_14 = arith.constant 0 : index
      %c0_15 = arith.constant 0 : index
      %22 = vector.load %arg3[%c0_13, %c0_14, %c0_15] : memref<1x1x1xf32, #tpu.memory_space<vmem>>, vector<1x1x1xf32>
      tpu.vector_store %arg3[%c0_13, %c0_14, %c0_15], %21 {strides = array<i32>} : memref<1x1x1xf32, #tpu.memory_space<vmem>>, vector<1x1x1xf32>,
    } else {
    }
    %c0 = arith.constant 0 : index
    %c0_1 = arith.constant 0 : index
    %c0_2 = arith.constant 0 : index
    %3 = vector.load %arg2[%c0, %c0_1, %c0_2] : memref<4x64x64xf32, #tpu.memory_space<vmem>>, vector<4x64x64xf32>
    "tpu.trace_start"() <{level = 10 : i32, message = "bij,bkj->bik"}> : () -> ()
    %cst = arith.constant dense<0.000000e+00> : vector<4x64x64xf32>
    %4 = tpu.matmul %3, %3, %cst {dimension_numbers = #tpu.dot_dimension_numbers<[2], [2], [1], [1], [0, 0, 0, 1, 1, 1], [0], [0]>} : vector<4x64x64xf32>, vector<4x64x64xf32>, vector<4x64x64xf32> -> vector<4x64x64xf32>
    "tpu.trace_stop"() : () -> ()
    %5 = arith.mulf %4, %4 : vector<4x64x64xf32>
    %6 = vector.shape_cast %5 : vector<4x64x64xf32> to vector<1x4x64x64xf32>
    %cst_3 = arith.constant dense<0.000000e+00> : vector<1xf32>
    %7 = vector.multi_reduction <add>, %6, %cst_3 [1, 2, 3] : vector<1x4x64x64xf32> to vector<1xf32>
    %8 = vector.shape_cast %7 : vector<1xf32> to vector<1x1x1x1xf32>
    %9 = vector.extract %8[0, 0, 0, 0] : f32 from vector<1x1x1x1xf32>
    %10 = arith.mulf %3, %3 : vector<4x64x64xf32>
    %11 = vector.shape_cast %10 : vector<4x64x64xf32> to vector<1x4x64x64xf32>
    %cst_4 = arith.constant dense<0.000000e+00> : vector<1xf32>
    %12 = vector.multi_reduction <add>, %11, %cst_4 [1, 2, 3] : vector<1x4x64x64xf32> to vector<1xf32>
    %13 = vector.shape_cast %12 : vector<1xf32> to vector<1x1x1x1xf32>
    %14 = vector.extract %13[0, 0, 0, 0] : f32 from vector<1x1x1x1xf32>
    %cst_5 = arith.constant 2.000000e+00 : f32
    %15 = arith.mulf %cst_5, %14 : f32
    %16 = arith.subf %9, %15 : f32
    %c0_6 = arith.constant 0 : index
    %c0_7 = arith.constant 0 : index
    %c0_8 = arith.constant 0 : index
    %17 = vector.load %arg3[%c0_6, %c0_7, %c0_8] : memref<1x1x1xf32, #tpu.memory_space<vmem>>, vector<1x1x1xf32>
    %18 = vector.broadcast %16 : f32 to vector<1x1x1xf32>
    %19 = arith.addf %17, %18 : vector<1x1x1xf32>
    %c0_9 = arith.constant 0 : index
    %c0_10 = arith.constant 0 : index
    %c0_11 = arith.constant 0 : index
    %20 = vector.load %arg3[%c0_9, %c0_10, %c0_11] : memref<1x1x1xf32, #tpu.memory_space<vmem>>, vector<1x1x1xf32>
    tpu.vector_store %arg3[%c0_9, %c0_10, %c0_11], %19 {strides = array<i32>} : memref<1x1x1xf32, #tpu.memory_space<vmem>>, vector<1x1x1xf32>,
    return
  }
  func.func @transform_0(%arg0: i32, %arg1: i32) -> (i32, i32, i32) {
    %c1_i32 = arith.constant 1 : i32
    %0 = arith.muli %arg0, %c1_i32 : i32
    %1 = arith.addi %0, %arg1 : i32
    %c0_i32 = arith.constant 0 : i32
    %c0_i32_0 = arith.constant 0 : i32
    %c0_i32_1 = arith.constant 0 : i32
    return %1, %c0_i32, %c0_i32_0 : i32, i32, i32
  }
  func.func @transform_1(%arg0: i32, %arg1: i32) -> (i32, i32, i32) {
    %c0_i32 = arith.constant 0 : i32
    %c0_i32_0 = arith.constant 0 : i32
    %c0_i32_1 = arith.constant 0 : i32
    return %arg0, %c0_i32, %c0_i32_0 : i32, i32, i32
  }
}

</mosaic_0001>

<llo_original>
// kernel: tpu_custom_call.1
$region0: #{tpu_custom_call.1}
  #allocation0 [shape = 'u32[]', space=smem, size = 0x4, offset = 0x4, fixed_abs, tag = 'smem constant byte address 0x4 - core index']
  #allocation1 [shape = 'u32[144,128]{1,0:T(1,128)}', space=vmem, size = 0x12000, scoped, tag = 'internal scratch']
  %s0 = inlined_call_operand.hbm [shape: f32[8,64,64], index: 0, kind: input, shape index: {}]
  %s1 = inlined_call_operand.vmem [shape: f32[2,1,1], index: 1, kind: output, shape index: {}]
  %s2 = sld [smem:[#allocation0]]
  $region45: #{tpu_custom_call.1} parent=0
    _
  %s4 = ssub.s32 1, %s2
  %s5 = scalar_select 0, %s4, %s2
  $region1: #{tpu_custom_call.1} parent=0
    #allocation2 [shape = 'u8[262144]{0}', space=vmem, size = 0x40000, scoped, tag = 'input window, operand 0']
    #allocation3 [shape = 's32[2]{0}', space=sflag, size = 0x8, scoped, tag = 'scoped memory for tpu_custom_call.1']
    %6 = vsyncpa [#allocation3], 0
    %s7 = scalar_lea.sflag [#allocation3], 1
    %8 = vsyncpa %s7, 0
    loop: start=0, step=1, limit=4
    $region2: #{tpu_custom_call.1} parent=1 // loop_pre_header
      _
    $region3: #{tpu_custom_call.1} parent=1 // loop_header
      %s10 = sphi 0, %s14
      %p11 = scmp.ge.s32.totalorder %s10, 4
      %s17 = sphi 0, %s29
      %s18 = sphi 0, %s25
      %s19 = sphi 0, %s17
      %s20 = sphi 0, %s18
      %s21 = sphi 0, %s19
      %s22 = sphi 0, %s20
      %s34 = sphi 0, %s36
      %s37 = sphi 0, %s34
      %s38 = sphi 0, %s37
      %s54 = sphi 0, %s38
      %s60 = sphi 0, %s62
      %s63 = sphi 0, %s60
      %s64 = sphi 0, %s63
      %s80 = sphi 0, %s64
    $region4: #{tpu_custom_call.1} parent=1 // loop_header_branch
      %13 = sbr.rel (%p11) target = $region8
    $region5: #{tpu_custom_call.1} parent=1 // loop_body
      %s15 = ssub.s32 %s10, 1
      %s16 = ssub.s32 %s10, 2
      %s23 = sadd.s32 1, %s18
      %p24 = scmp.ge.s32.totalorder %s23, 1
      %s25 = scalar_select %p24, 0, %s23
      %s26 = sadd.s32 1, %s17
      %s27 = scalar_select %p24, %s26, %s17
      %p28 = scmp.ge.s32.totalorder %s27, 2
      %s29 = scalar_select %p28, 0, %s27
      %s30 = sadd.s32 %s17, %s18
      %s31 = sadd.s32 %s29, %s25
      %s32 = ssub.s32 %s30, %s31
      %p33 = scmp.eq.s32.totalorder %s32, 0
      %s35 = sadd.s32 %s34, 1
      %s36 = scalar_select %p33, %s34, %s35
      %p39 = pneg %p33
      %p40 = scmp.eq.s32.totalorder %s10, 1
      %p41 = por %p39, %p40
      %p42 = scmp.ne.s32.totalorder %s34, %s37
      %p43 = scmp.eq.s32.totalorder %s10, 0
      %p44 = por %p42, %p43
      %p45 = scmp.ne.s32.totalorder %s34, %s37
      %p46 = scmp.eq.s32.totalorder %s15, 1
      %p47 = por %p45, %p46
      %p48 = scmp.ne.s32.totalorder %s37, %s38
      %p49 = scmp.eq.s32.totalorder %s15, 0
      %p50 = por %p48, %p49
      %p51 = scmp.ne.s32.totalorder %s37, %s38
      %p52 = scmp.eq.s32.totalorder %s16, 1
      %p53 = por %p51, %p52
      %p55 = scmp.ne.s32.totalorder %s38, %s54
      %p56 = scmp.eq.s32.totalorder %s16, 0
      %p57 = por %p55, %p56
      %s58 = ssub.s32 %s17, %s29
      %p59 = scmp.eq.s32.totalorder %s58, 0
      %s61 = sadd.s32 %s60, 1
      %s62 = scalar_select %p59, %s60, %s61
      %p65 = pneg %p59
      %p66 = scmp.eq.s32.totalorder %s10, 1
      %p67 = por %p65, %p66
      %p68 = scmp.ne.s32.totalorder %s60, %s63
      %p69 = scmp.eq.s32.totalorder %s10, 0
      %p70 = por %p68, %p69
      %p71 = scmp.ne.s32.totalorder %s60, %s63
      %p72 = scmp.eq.s32.totalorder %s15, 1
      %p73 = por %p71, %p72
      %p74 = scmp.ne.s32.totalorder %s63, %s64
      %p75 = scmp.eq.s32.totalorder %s15, 0
      %p76 = por %p74, %p75
      %p77 = scmp.ne.s32.totalorder %s63, %s64
      %p78 = scmp.eq.s32.totalorder %s16, 1
      %p79 = por %p77, %p78
      %p81 = scmp.ne.s32.totalorder %s64, %s80
      %p82 = scmp.eq.s32.totalorder %s16, 0
      %p83 = por %p81, %p82
      %p84 = scmp.le.s32.totalorder 1, %s10
      %p85 = scmp.lt.s32.totalorder %s10, 3
      %p86 = pnand %p84, %p85
      %p87 = pneg %p86
      // Predicated region
      $region9: #{tpu_custom_call.1} parent=5 // pred_check
        _
      $region10: #{tpu_custom_call.1} parent=5 // pred_check_branch
        %89 = sbr.rel (%p86) target = $region12
      $region11: #{tpu_custom_call.1} parent=5 // pred_region
        %s90 = ssub.s32 %s10, 1
      $region12: #{tpu_custom_call.1} parent=5 // pred_fallthru
        _
      %p91 = scmp.lt.s32.totalorder %s10, 2
      // Predicated region
      $region13: #{tpu_custom_call.1} parent=5 // pred_check
        %p92 = pneg %p91
      $region14: #{tpu_custom_call.1} parent=5 // pred_check_branch
        %94 = sbr.rel (%p92) target = $region16
      $region15: #{tpu_custom_call.1} parent=5 // pred_region
        // Predicated region
        $region17: #{tpu_custom_call.1} parent=15 // pred_check
          %p95 = pneg %p44
        $region18: #{tpu_custom_call.1} parent=15 // pred_check_branch
          %97 = sbr.rel (%p95) target = $region20
        $region19: #{tpu_custom_call.1} parent=15 // pred_region
          %s98 = sand.u32 %s34, 1
          %s99 = scalar_lea.sflag [#allocation3], %s98
          %s100 = sand.u32 %s34, 1
          %s101 = smul.addr %s100, 256
          %s102 = scalar_lea.vmem [#allocation2], %s101
          %s103 = sadd.s32 %s17, %s18
          %s104 = smul.u32 4, %s103
          %s106 = ssub.s32 4096, 4096
          %107 = vsyncadd %s99, %s106
          %s108 = smul.addr %s104, 8
          %s109 = smul.addr %s108, 128
          %s110 = scalar_lea.hbm %s0, %s109
          %s111 = sshll.u32 %s102, 4
          %s112 = int_to_ptr.vmem [resolvable:$true] %s111
          %117 = dma.hbm_to_vmem [thread:$0]  %s110, 4096, %s112, %s99, 128, 128, 8
        $region20: #{tpu_custom_call.1} parent=15 // pred_fallthru
          _
      $region16: #{tpu_custom_call.1} parent=5 // pred_fallthru
        _
      %p118 = scmp.le.s32.totalorder 1, %s10
      %p119 = scmp.lt.s32.totalorder %s10, 3
      %p120 = pnand %p118, %p119
      %p121 = pneg %p120
      // Predicated region
      $region21: #{tpu_custom_call.1} parent=5 // pred_check
        _
      $region22: #{tpu_custom_call.1} parent=5 // pred_check_branch
        %123 = sbr.rel (%p120) target = $region24
      $region23: #{tpu_custom_call.1} parent=5 // pred_region
        %s124 = ssub.s32 %s10, 1
        %s125 = sand.u32 %s37, 1
        %s126 = scalar_lea.sflag [#allocation3], %s125
        %s127 = sand.u32 %s37, 1
        %s128 = smul.addr %s127, 256
        %s129 = scalar_lea.vmem [#allocation2], %s128
        // Predicated region
        $region25: #{tpu_custom_call.1} parent=23 // pred_check
          %p130 = pneg %p50
        $region26: #{tpu_custom_call.1} parent=23 // pred_check_branch
          %132 = sbr.rel (%p130) target = $region28
        $region27: #{tpu_custom_call.1} parent=23 // pred_region
          %133 = dma.done %s126, 4096
        $region28: #{tpu_custom_call.1} parent=23 // pred_fallthru
          _
        %s134 = sand.u32 %s37, 1
        %s135 = scalar_lea.sflag [#allocation3], %s134
        %s136 = sand.u32 %s37, 1
        %s137 = smul.addr %s136, 256
        %s138 = scalar_lea.vmem [#allocation2], %s137
        %p139 = pneg %p50
        %p140 = pneg %p47
        %p141 = pneg %p76
        %p142 = pneg %p73
        %p143 = scmp.lt.s32.totalorder %s19, 1
        %s144 = scalar_select %p143, %s19, 1
        %s145 = scalar_lea.vmem %s1, %s144
        %s146 = sadd.s32 %s19, %s20
        %s147 = smul.u32 4, %s146
        %p148 = scmp.lt.s32.totalorder %s19, 1
        %s149 = scalar_select %p148, %s19, 1
        %s150 = scalar_lea.vmem %s1, %s149
        %p151 = scmp.eq.s32.totalorder %s20, 0
        // Predicated region
        $region29: #{tpu_custom_call.1} parent=23 // pred_check
          %p152 = pneg %p151
        $region30: #{tpu_custom_call.1} parent=23 // pred_check_branch
          %154 = sbr.rel (%p152) target = $region32
        $region31: #{tpu_custom_call.1} parent=23 // pred_region
          %vm155 = vcmask 0
          %156 = vst.msk [vmem:[%s150] sm:$0x1] %vm155, 0.0
        $region32: #{tpu_custom_call.1} parent=23 // pred_fallthru
          _
        %v157 = vld [vmem:[%s129] sm:$0xff]
        %v158 = vld [vmem:[%s129 + $0x8] sm:$0xff]
        %v159 = vld [vmem:[%s129 + $0x10] sm:$0xff]
        %v160 = vld [vmem:[%s129 + $0x18] sm:$0xff]
        %v161 = vld [vmem:[%s129 + $0x20] sm:$0xff]
        %v162 = vld [vmem:[%s129 + $0x28] sm:$0xff]
        %v163 = vld [vmem:[%s129 + $0x30] sm:$0xff]
        %v164 = vld [vmem:[%s129 + $0x38] sm:$0xff]
        %v165 = vld [vmem:[%s129 + $0x40] sm:$0xff]
        %v166 = vld [vmem:[%s129 + $0x48] sm:$0xff]
        %v167 = vld [vmem:[%s129 + $0x50] sm:$0xff]
        %v168 = vld [vmem:[%s129 + $0x58] sm:$0xff]
        %v169 = vld [vmem:[%s129 + $0x60] sm:$0xff]
        %v170 = vld [vmem:[%s129 + $0x68] sm:$0xff]
        %v171 = vld [vmem:[%s129 + $0x70] sm:$0xff]
        %v172 = vld [vmem:[%s129 + $0x78] sm:$0xff]
        %v173 = vld [vmem:[%s129 + $0x80] sm:$0xff]
        %v174 = vld [vmem:[%s129 + $0x88] sm:$0xff]
        %v175 = vld [vmem:[%s129 + $0x90] sm:$0xff]
        %v176 = vld [vmem:[%s129 + $0x98] sm:$0xff]
        %v177 = vld [vmem:[%s129 + $0xa0] sm:$0xff]
        %v178 = vld [vmem:[%s129 + $0xa8] sm:$0xff]
        %v179 = vld [vmem:[%s129 + $0xb0] sm:$0xff]
        %v180 = vld [vmem:[%s129 + $0xb8] sm:$0xff]
        %v181 = vld [vmem:[%s129 + $0xc0] sm:$0xff]
        %v182 = vld [vmem:[%s129 + $0xc8] sm:$0xff]
        %v183 = vld [vmem:[%s129 + $0xd0] sm:$0xff]
        %v184 = vld [vmem:[%s129 + $0xd8] sm:$0xff]
        %v185 = vld [vmem:[%s129 + $0xe0] sm:$0xff]
        %v186 = vld [vmem:[%s129 + $0xe8] sm:$0xff]
        %v187 = vld [vmem:[%s129 + $0xf0] sm:$0xff]
        %v188 = vld [vmem:[%s129 + $0xf8] sm:$0xff]
        %vm189 = vcmask 523264
        %v191 = vsel %vm189, %v157, 0
        %v194 = vsel %vm189, %v158, 0
        %v197 = vsel %vm189, %v159, 0
        %v200 = vsel %vm189, %v160, 0
        %v203 = vsel %vm189, %v161, 0
        %v206 = vsel %vm189, %v162, 0
        %v209 = vsel %vm189, %v163, 0
        %v212 = vsel %vm189, %v164, 0
        %214 = vmatprep.subr.mxu0 0.0
        %215 = vmatpush1.xpose.msra.mxu0 %v191
        %216 = vmatprep.subr.mxu0 0.0
        %217 = vmatpush1.xpose.msra.mxu0 %v194
        %218 = vmatprep.subr.mxu0 0.0
        %219 = vmatpush1.xpose.msra.mxu0 %v197
        %220 = vmatprep.subr.mxu0 0.0
        %221 = vmatpush1.xpose.msra.mxu0 %v200
        %222 = vmatprep.subr.mxu0 0.0
        %223 = vmatpush1.xpose.msra.mxu0 %v203
        %224 = vmatprep.subr.mxu0 0.0
        %225 = vmatpush1.xpose.msra.mxu0 %v206
        %226 = vmatprep.subr.mxu0 0.0
        %227 = vmatpush1.xpose.msra.mxu0 %v209
        %228 = vmatprep.subr.mxu0 0.0
        %229 = vmatpush1.xpose.msra.mxu0 %v212
        %230 = vmatprep.subr.mxu0 0.0
        %231 = vmatpush1.xpose.msra.mxu0 0.0
        %232 = vmatprep.subr.mxu0 0.0
        %233 = vmatpush1.xpose.msra.mxu0 0.0
        %234 = vmatprep.subr.mxu0 0.0
        %235 = vmatpush1.xpose.msra.mxu0 0.0
        %236 = vmatprep.subr.mxu0 0.0
        %237 = vmatpush1.xpose.msra.mxu0 0.0
        %238 = vmatprep.subr.mxu0 0.0
        %239 = vmatpush1.xpose.msra.mxu0 0.0
        %240 = vmatprep.subr.mxu0 0.0
        %241 = vmatpush1.xpose.msra.mxu0 0.0
        %242 = vmatprep.subr.mxu0 0.0
        %243 = vmatpush1.xpose.msra.mxu0 0.0
        %244 = vmatprep.subr.mxu0 0.0
        %245 = vmatpush1.xpose.msra.mxu0 0.0
        %246 = vmatprep.subr.mxu0 0.0
        %247 = vmatpush1.xpose.msra.mxu0 0.0
        %248 = vmatprep.subr.mxu0 0.0
        %249 = vmatpush1.xpose.msra.mxu0 0.0
        %250 = vmatprep.subr.mxu0 0.0
        %251 = vmatpush1.xpose.msra.mxu0 0.0
        %252 = vmatprep.subr.mxu0 0.0
        %253 = vmatpush1.xpose.msra.mxu0 0.0
        %254 = vmatprep.subr.mxu0 0.0
        %255 = vmatpush1.xpose.msra.mxu0 0.0
        %256 = vmatprep.subr.mxu0 0.0
        %257 = vmatpush1.xpose.msra.mxu0 0.0
        %258 = vmatprep.subr.mxu0 0.0
        %259 = vmatpush1.xpose.msra.mxu0 0.0
        %260 = vmatprep.subr.mxu0 0.0
        %261 = vmatpush1.xpose.msra.mxu0 0.0
        %262 = vmatprep.subr.mxu0 0.0
        %263 = vmatpush1.xpose.msra.mxu0 0.0
        %264 = vmatprep.subr.mxu0 0.0
        %265 = vmatpush1.xpose.msra.mxu0 0.0
        %266 = vmatprep.subr.mxu0 0.0
        %267 = vmatpush1.xpose.msra.mxu0 0.0
        %268 = vmatprep.subr.mxu0 0.0
        %269 = vmatpush1.xpose.msra.mxu0 0.0
        %270 = vmatprep.subr.mxu0 0.0
        %271 = vmatpush1.xpose.msra.mxu0 0.0
        %272 = vmatprep.subr.mxu0 0.0
        %273 = vmatpush1.xpose.msra.mxu0 0.0
        %274 = vmatprep.subr.mxu0 0.0
        %275 = vmatpush1.xpose.msra.mxu0 0.0
        %276 = vmatprep.subr.mxu0 0.0
        %277 = vmatpush1.xpose.msra.mxu0 0.0
        %278 = vmatprep.mubr.f32.mxu0 0.0
        %279 = vmatmul.mubr.f32.gmra.mrb[0].mxu0 %v191
        %v280 = vpop.f32.mrb[0].mxu0
        %v281 = vadd.f32 0.0, %v280
        %v282 = vpop.f32.mrb[0].mxu0
        %283 = vmatprep.mubr.f32.mxu0 0.0
        %284 = vmatmul.mubr.f32.gmra.mrb[0].mxu0 %v194
        %v285 = vpop.f32.mrb[0].mxu0
        %v286 = vadd.f32 0.0, %v285
        %v287 = vpop.f32.mrb[0].mxu0
        %288 = vmatprep.mubr.f32.mxu0 0.0
        %289 = vmatmul.mubr.f32.gmra.mrb[0].mxu0 %v197
        %v290 = vpop.f32.mrb[0].mxu0
        %v291 = vadd.f32 0.0, %v290
        %v292 = vpop.f32.mrb[0].mxu0
        %293 = vmatprep.mubr.f32.mxu0 0.0
        %294 = vmatmul.mubr.f32.gmra.mrb[0].mxu0 %v200
        %v295 = vpop.f32.mrb[0].mxu0
        %v296 = vadd.f32 0.0, %v295
        %v297 = vpop.f32.mrb[0].mxu0
        %298 = vmatprep.mubr.f32.mxu0 0.0
        %299 = vmatmul.mubr.f32.gmra.mrb[0].mxu0 %v203
        %v300 = vpop.f32.mrb[0].mxu0
        %v301 = vadd.f32 0.0, %v300
        %v302 = vpop.f32.mrb[0].mxu0
        %303 = vmatprep.mubr.f32.mxu0 0.0
        %304 = vmatmul.mubr.f32.gmra.mrb[0].mxu0 %v206
        %v305 = vpop.f32.mrb[0].mxu0
        %v306 = vadd.f32 0.0, %v305
        %v307 = vpop.f32.mrb[0].mxu0
        %308 = vmatprep.mubr.f32.mxu0 0.0
        %309 = vmatmul.mubr.f32.gmra.mrb[0].mxu0 %v209
        %v310 = vpop.f32.mrb[0].mxu0
        %v311 = vadd.f32 0.0, %v310
        %v312 = vpop.f32.mrb[0].mxu0
        %313 = vmatprep.mubr.f32.mxu0 0.0
        %314 = vmatmul.mubr.f32.gmra.mrb[0].mxu0 %v212
        %v315 = vpop.f32.mrb[0].mxu0
        %v316 = vadd.f32 0.0, %v315
        %v317 = vpop.f32.mrb[0].mxu0
        %318 = vdwg.mxu0
        %v320 = vsel %vm189, %v165, 0
        %v323 = vsel %vm189, %v166, 0
        %v326 = vsel %vm189, %v167, 0
        %v329 = vsel %vm189, %v168, 0
        %v332 = vsel %vm189, %v169, 0
        %v335 = vsel %vm189, %v170, 0
        %v338 = vsel %vm189, %v171, 0
        %v341 = vsel %vm189, %v172, 0
        %343 = vmatprep.subr.mxu0 0.0
        %344 = vmatpush1.xpose.msra.mxu0 %v320
        %345 = vmatprep.subr.mxu0 0.0
        %346 = vmatpush1.xpose.msra.mxu0 %v323
        %347 = vmatprep.subr.mxu0 0.0
        %348 = vmatpush1.xpose.msra.mxu0 %v326
        %349 = vmatprep.subr.mxu0 0.0
        %350 = vmatpush1.xpose.msra.mxu0 %v329
        %351 = vmatprep.subr.mxu0 0.0
        %352 = vmatpush1.xpose.msra.mxu0 %v332
        %353 = vmatprep.subr.mxu0 0.0
        %354 = vmatpush1.xpose.msra.mxu0 %v335
        %355 = vmatprep.subr.mxu0 0.0
        %356 = vmatpush1.xpose.msra.mxu0 %v338
        %357 = vmatprep.subr.mxu0 0.0
        %358 = vmatpush1.xpose.msra.mxu0 %v341
        %359 = vmatprep.subr.mxu0 0.0
        %360 = vmatpush1.xpose.msra.mxu0 0.0
        %361 = vmatprep.subr.mxu0 0.0
        %362 = vmatpush1.xpose.msra.mxu0 0.0
        %363 = vmatprep.subr.mxu0 0.0
        %364 = vmatpush1.xpose.msra.mxu0 0.0
        %365 = vmatprep.subr.mxu0 0.0
        %366 = vmatpush1.xpose.msra.mxu0 0.0
        %367 = vmatprep.subr.mxu0 0.0
        %368 = vmatpush1.xpose.msra.mxu0 0.0
        %369 = vmatprep.subr.mxu0 0.0
        %370 = vmatpush1.xpose.msra.mxu0 0.0
        %371 = vmatprep.subr.mxu0 0.0
        %372 = vmatpush1.xpose.msra.mxu0 0.0
        %373 = vmatprep.subr.mxu0 0.0
        %374 = vmatpush1.xpose.msra.mxu0 0.0
        %375 = vmatprep.subr.mxu0 0.0
        %376 = vmatpush1.xpose.msra.mxu0 0.0
        %377 = vmatprep.subr.mxu0 0.0
        %378 = vmatpush1.xpose.msra.mxu0 0.0
        %379 = vmatprep.subr.mxu0 0.0
        %380 = vmatpush1.xpose.msra.mxu0 0.0
        %381 = vmatprep.subr.mxu0 0.0
        %382 = vmatpush1.xpose.msra.mxu0 0.0
        %383 = vmatprep.subr.mxu0 0.0
        %384 = vmatpush1.xpose.msra.mxu0 0.0
        %385 = vmatprep.subr.mxu0 0.0
        %386 = vmatpush1.xpose.msra.mxu0 0.0
        %387 = vmatprep.subr.mxu0 0.0
        %388 = vmatpush1.xpose.msra.mxu0 0.0
        %389 = vmatprep.subr.mxu0 0.0
        %390 = vmatpush1.xpose.msra.mxu0 0.0
        %391 = vmatprep.subr.mxu0 0.0
        %392 = vmatpush1.xpose.msra.mxu0 0.0
        %393 = vmatprep.subr.mxu0 0.0
        %394 = vmatpush1.xpose.msra.mxu0 0.0
        %395 = vmatprep.subr.mxu0 0.0
        %396 = vmatpush1.xpose.msra.mxu0 0.0
        %397 = vmatprep.subr.mxu0 0.0
        %398 = vmatpush1.xpose.msra.mxu0 0.0
        %399 = vmatprep.subr.mxu0 0.0
        %400 = vmatpush1.xpose.msra.mxu0 0.0
        %401 = vmatprep.subr.mxu0 0.0
        %402 = vmatpush1.xpose.msra.mxu0 0.0
        %403 = vmatprep.subr.mxu0 0.0
        %404 = vmatpush1.xpose.msra.mxu0 0.0
        %405 = vmatprep.subr.mxu0 0.0
        %406 = vmatpush1.xpose.msra.mxu0 0.0
        %407 = vmatprep.mubr.f32.mxu0 0.0
        %408 = vmatmul.mubr.f32.gmra.mrb[0].mxu0 %v320
        %v409 = vpop.f32.mrb[0].mxu0
        %v410 = vadd.f32 0.0, %v409
        %v411 = vpop.f32.mrb[0].mxu0
        %412 = vmatprep.mubr.f32.mxu0 0.0
        %413 = vmatmul.mubr.f32.gmra.mrb[0].mxu0 %v323
        %v414 = vpop.f32.mrb[0].mxu0
        %v415 = vadd.f32 0.0, %v414
        %v416 = vpop.f32.mrb[0].mxu0
        %417 = vmatprep.mubr.f32.mxu0 0.0
        %418 = vmatmul.mubr.f32.gmra.mrb[0].mxu0 %v326
        %v419 = vpop.f32.mrb[0].mxu0
        %v420 = vadd.f32 0.0, %v419
        %v421 = vpop.f32.mrb[0].mxu0
        %422 = vmatprep.mubr.f32.mxu0 0.0
        %423 = vmatmul.mubr.f32.gmra.mrb[0].mxu0 %v329
        %v424 = vpop.f32.mrb[0].mxu0
        %v425 = vadd.f32 0.0, %v424
        %v426 = vpop.f32.mrb[0].mxu0
        %427 = vmatprep.mubr.f32.mxu0 0.0
        %428 = vmatmul.mubr.f32.gmra.mrb[0].mxu0 %v332
        %v429 = vpop.f32.mrb[0].mxu0
        %v430 = vadd.f32 0.0, %v429
        %v431 = vpop.f32.mrb[0].mxu0
        %432 = vmatprep.mubr.f32.mxu0 0.0
        %433 = vmatmul.mubr.f32.gmra.mrb[0].mxu0 %v335
        %v434 = vpop.f32.mrb[0].mxu0
        %v435 = vadd.f32 0.0, %v434
        %v436 = vpop.f32.mrb[0].mxu0
        %437 = vmatprep.mubr.f32.mxu0 0.0
        %438 = vmatmul.mubr.f32.gmra.mrb[0].mxu0 %v338
        %v439 = vpop.f32.mrb[0].mxu0
        %v440 = vadd.f32 0.0, %v439
        %v441 = vpop.f32.mrb[0].mxu0
        %442 = vmatprep.mubr.f32.mxu0 0.0
        %443 = vmatmul.mubr.f32.gmra.mrb[0].mxu0 %v341
        %v444 = vpop.f32.mrb[0].mxu0
        %v445 = vadd.f32 0.0, %v444
        %v446 = vpop.f32.mrb[0].mxu0
        %447 = vdwg.mxu0
        %v449 = vsel %vm189, %v173, 0
        %v452 = vsel %vm189, %v174, 0
        %v455 = vsel %vm189, %v175, 0
        %v458 = vsel %vm189, %v176, 0
        %v461 = vsel %vm189, %v177, 0
        %v464 = vsel %vm189, %v178, 0
        %v467 = vsel %vm189, %v179, 0
        %v470 = vsel %vm189, %v180, 0
        %472 = vmatprep.subr.mxu0 0.0
        %473 = vmatpush1.xpose.msra.mxu0 %v449
        %474 = vmatprep.subr.mxu0 0.0
        %475 = vmatpush1.xpose.msra.mxu0 %v452
        %476 = vmatprep.subr.mxu0 0.0
        %477 = vmatpush1.xpose.msra.mxu0 %v455
        %478 = vmatprep.subr.mxu0 0.0
        %479 = vmatpush1.xpose.msra.mxu0 %v458
        %480 = vmatprep.subr.mxu0 0.0
        %481 = vmatpush1.xpose.msra.mxu0 %v461
        %482 = vmatprep.subr.mxu0 0.0
        %483 = vmatpush1.xpose.msra.mxu0 %v464
        %484 = vmatprep.subr.mxu0 0.0
        %485 = vmatpush1.xpose.msra.mxu0 %v467
        %486 = vmatprep.subr.mxu0 0.0
        %487 = vmatpush1.xpose.msra.mxu0 %v470
        %488 = vmatprep.subr.mxu0 0.0
        %489 = vmatpush1.xpose.msra.mxu0 0.0
        %490 = vmatprep.subr.mxu0 0.0
        %491 = vmatpush1.xpose.msra.mxu0 0.0
        %492 = vmatprep.subr.mxu0 0.0
        %493 = vmatpush1.xpose.msra.mxu0 0.0
        %494 = vmatprep.subr.mxu0 0.0
        %495 = vmatpush1.xpose.msra.mxu0 0.0
        %496 = vmatprep.subr.mxu0 0.0
        %497 = vmatpush1.xpose.msra.mxu0 0.0
        %498 = vmatprep.subr.mxu0 0.0
        %499 = vmatpush1.xpose.msra.mxu0 0.0
        %500 = vmatprep.subr.mxu0 0.0
        %501 = vmatpush1.xpose.msra.mxu0 0.0
        %502 = vmatprep.subr.mxu0 0.0
        %503 = vmatpush1.xpose.msra.mxu0 0.0
        %504 = vmatprep.subr.mxu0 0.0
        %505 = vmatpush1.xpose.msra.mxu0 0.0
        %506 = vmatprep.subr.mxu0 0.0
        %507 = vmatpush1.xpose.msra.mxu0 0.0
        %508 = vmatprep.subr.mxu0 0.0
        %509 = vmatpush1.xpose.msra.mxu0 0.0
        %510 = vmatprep.subr.mxu0 0.0
        %511 = vmatpush1.xpose.msra.mxu0 0.0
        %512 = vmatprep.subr.mxu0 0.0
        %513 = vmatpush1.xpose.msra.mxu0 0.0
        %514 = vmatprep.subr.mxu0 0.0
        %515 = vmatpush1.xpose.msra.mxu0 0.0
        %516 = vmatprep.subr.mxu0 0.0
        %517 = vmatpush1.xpose.msra.mxu0 0.0
        %518 = vmatprep.subr.mxu0 0.0
        %519 = vmatpush1.xpose.msra.mxu0 0.0
        %520 = vmatprep.subr.mxu0 0.0
        %521 = vmatpush1.xpose.msra.mxu0 0.0
        %522 = vmatprep.subr.mxu0 0.0
        %523 = vmatpush1.xpose.msra.mxu0 0.0
        %524 = vmatprep.subr.mxu0 0.0
        %525 = vmatpush1.xpose.msra.mxu0 0.0
        %526 = vmatprep.subr.mxu0 0.0
        %527 = vmatpush1.xpose.msra.mxu0 0.0
        %528 = vmatprep.subr.mxu0 0.0
        %529 = vmatpush1.xpose.msra.mxu0 0.0
        %530 = vmatprep.subr.mxu0 0.0
        %531 = vmatpush1.xpose.msra.mxu0 0.0
        %532 = vmatprep.subr.mxu0 0.0
        %533 = vmatpush1.xpose.msra.mxu0 0.0
        %534 = vmatprep.subr.mxu0 0.0
        %535 = vmatpush1.xpose.msra.mxu0 0.0
        %536 = vmatprep.mubr.f32.mxu0 0.0
        %537 = vmatmul.mubr.f32.gmra.mrb[0].mxu0 %v449
        %v538 = vpop.f32.mrb[0].mxu0
        %v539 = vadd.f32 0.0, %v538
        %v540 = vpop.f32.mrb[0].mxu0
        %541 = vmatprep.mubr.f32.mxu0 0.0
        %542 = vmatmul.mubr.f32.gmra.mrb[0].mxu0 %v452
        %v543 = vpop.f32.mrb[0].mxu0
        %v544 = vadd.f32 0.0, %v543
        %v545 = vpop.f32.mrb[0].mxu0
        %546 = vmatprep.mubr.f32.mxu0 0.0
        %547 = vmatmul.mubr.f32.gmra.mrb[0].mxu0 %v455
        %v548 = vpop.f32.mrb[0].mxu0
        %v549 = vadd.f32 0.0, %v548
        %v550 = vpop.f32.mrb[0].mxu0
        %551 = vmatprep.mubr.f32.mxu0 0.0
        %552 = vmatmul.mubr.f32.gmra.mrb[0].mxu0 %v458
        %v553 = vpop.f32.mrb[0].mxu0
        %v554 = vadd.f32 0.0, %v553
        %v555 = vpop.f32.mrb[0].mxu0
        %556 = vmatprep.mubr.f32.mxu0 0.0
        %557 = vmatmul.mubr.f32.gmra.mrb[0].mxu0 %v461
        %v558 = vpop.f32.mrb[0].mxu0
        %v559 = vadd.f32 0.0, %v558
        %v560 = vpop.f32.mrb[0].mxu0
        %561 = vmatprep.mubr.f32.mxu0 0.0
        %562 = vmatmul.mubr.f32.gmra.mrb[0].mxu0 %v464
        %v563 = vpop.f32.mrb[0].mxu0
        %v564 = vadd.f32 0.0, %v563
        %v565 = vpop.f32.mrb[0].mxu0
        %566 = vmatprep.mubr.f32.mxu0 0.0
        %567 = vmatmul.mubr.f32.gmra.mrb[0].mxu0 %v467
        %v568 = vpop.f32.mrb[0].mxu0
        %v569 = vadd.f32 0.0, %v568
        %v570 = vpop.f32.mrb[0].mxu0
        %571 = vmatprep.mubr.f32.mxu0 0.0
        %572 = vmatmul.mubr.f32.gmra.mrb[0].mxu0 %v470
        %v573 = vpop.f32.mrb[0].mxu0
        %v574 = vadd.f32 0.0, %v573
        %v575 = vpop.f32.mrb[0].mxu0
        %576 = vdwg.mxu0
        %v578 = vsel %vm189, %v181, 0
        %v581 = vsel %vm189, %v182, 0
        %v584 = vsel %vm189, %v183, 0
        %v587 = vsel %vm189, %v184, 0
        %v590 = vsel %vm189, %v185, 0
        %v593 = vsel %vm189, %v186, 0
        %v596 = vsel %vm189, %v187, 0
        %v599 = vsel %vm189, %v188, 0
        %601 = vmatprep.subr.mxu0 0.0
        %602 = vmatpush1.xpose.msra.mxu0 %v578
        %603 = vmatprep.subr.mxu0 0.0
        %604 = vmatpush1.xpose.msra.mxu0 %v581
        %605 = vmatprep.subr.mxu0 0.0
        %606 = vmatpush1.xpose.msra.mxu0 %v584
        %607 = vmatprep.subr.mxu0 0.0
        %608 = vmatpush1.xpose.msra.mxu0 %v587
        %609 = vmatprep.subr.mxu0 0.0
        %610 = vmatpush1.xpose.msra.mxu0 %v590
        %611 = vmatprep.subr.mxu0 0.0
        %612 = vmatpush1.xpose.msra.mxu0 %v593
        %613 = vmatprep.subr.mxu0 0.0
        %614 = vmatpush1.xpose.msra.mxu0 %v596
        %615 = vmatprep.subr.mxu0 0.0
        %616 = vmatpush1.xpose.msra.mxu0 %v599
        %617 = vmatprep.subr.mxu0 0.0
        %618 = vmatpush1.xpose.msra.mxu0 0.0
        %619 = vmatprep.subr.mxu0 0.0
        %620 = vmatpush1.xpose.msra.mxu0 0.0
        %621 = vmatprep.subr.mxu0 0.0
        %622 = vmatpush1.xpose.msra.mxu0 0.0
        %623 = vmatprep.subr.mxu0 0.0
        %624 = vmatpush1.xpose.msra.mxu0 0.0
        %625 = vmatprep.subr.mxu0 0.0
        %626 = vmatpush1.xpose.msra.mxu0 0.0
        %627 = vmatprep.subr.mxu0 0.0
        %628 = vmatpush1.xpose.msra.mxu0 0.0
        %629 = vmatprep.subr.mxu0 0.0
        %630 = vmatpush1.xpose.msra.mxu0 0.0
        %631 = vmatprep.subr.mxu0 0.0
        %632 = vmatpush1.xpose.msra.mxu0 0.0
        %633 = vmatprep.subr.mxu0 0.0
        %634 = vmatpush1.xpose.msra.mxu0 0.0
        %635 = vmatprep.subr.mxu0 0.0
        %636 = vmatpush1.xpose.msra.mxu0 0.0
        %637 = vmatprep.subr.mxu0 0.0
        %638 = vmatpush1.xpose.msra.mxu0 0.0
        %639 = vmatprep.subr.mxu0 0.0
        %640 = vmatpush1.xpose.msra.mxu0 0.0
        %641 = vmatprep.subr.mxu0 0.0
        %642 = vmatpush1.xpose.msra.mxu0 0.0
        %643 = vmatprep.subr.mxu0 0.0
        %644 = vmatpush1.xpose.msra.mxu0 0.0
        %645 = vmatprep.subr.mxu0 0.0
        %646 = vmatpush1.xpose.msra.mxu0 0.0
        %647 = vmatprep.subr.mxu0 0.0
        %648 = vmatpush1.xpose.msra.mxu0 0.0
        %649 = vmatprep.subr.mxu0 0.0
        %650 = vmatpush1.xpose.msra.mxu0 0.0
        %651 = vmatprep.subr.mxu0 0.0
        %652 = vmatpush1.xpose.msra.mxu0 0.0
        %653 = vmatprep.subr.mxu0 0.0
        %654 = vmatpush1.xpose.msra.mxu0 0.0
        %655 = vmatprep.subr.mxu0 0.0
        %656 = vmatpush1.xpose.msra.mxu0 0.0
        %657 = vmatprep.subr.mxu0 0.0
        %658 = vmatpush1.xpose.msra.mxu0 0.0
        %659 = vmatprep.subr.mxu0 0.0
        %660 = vmatpush1.xpose.msra.mxu0 0.0
        %661 = vmatprep.subr.mxu0 0.0
        %662 = vmatpush1.xpose.msra.mxu0 0.0
        %663 = vmatprep.subr.mxu0 0.0
        %664 = vmatpush1.xpose.msra.mxu0 0.0
        %665 = vmatprep.mubr.f32.mxu0 0.0
        %666 = vmatmul.mubr.f32.gmra.mrb[0].mxu0 %v578
        %v667 = vpop.f32.mrb[0].mxu0
        %v668 = vadd.f32 0.0, %v667
        %v669 = vpop.f32.mrb[0].mxu0
        %670 = vmatprep.mubr.f32.mxu0 0.0
        %671 = vmatmul.mubr.f32.gmra.mrb[0].mxu0 %v581
        %v672 = vpop.f32.mrb[0].mxu0
        %v673 = vadd.f32 0.0, %v672
        %v674 = vpop.f32.mrb[0].mxu0
        %675 = vmatprep.mubr.f32.mxu0 0.0
        %676 = vmatmul.mubr.f32.gmra.mrb[0].mxu0 %v584
        %v677 = vpop.f32.mrb[0].mxu0
        %v678 = vadd.f32 0.0, %v677
        %v679 = vpop.f32.mrb[0].mxu0
        %680 = vmatprep.mubr.f32.mxu0 0.0
        %681 = vmatmul.mubr.f32.gmra.mrb[0].mxu0 %v587
        %v682 = vpop.f32.mrb[0].mxu0
        %v683 = vadd.f32 0.0, %v682
        %v684 = vpop.f32.mrb[0].mxu0
        %685 = vmatprep.mubr.f32.mxu0 0.0
        %686 = vmatmul.mubr.f32.gmra.mrb[0].mxu0 %v590
        %v687 = vpop.f32.mrb[0].mxu0
        %v688 = vadd.f32 0.0, %v687
        %v689 = vpop.f32.mrb[0].mxu0
        %690 = vmatprep.mubr.f32.mxu0 0.0
        %691 = vmatmul.mubr.f32.gmra.mrb[0].mxu0 %v593
        %v692 = vpop.f32.mrb[0].mxu0
        %v693 = vadd.f32 0.0, %v692
        %v694 = vpop.f32.mrb[0].mxu0
        %695 = vmatprep.mubr.f32.mxu0 0.0
        %696 = vmatmul.mubr.f32.gmra.mrb[0].mxu0 %v596
        %v697 = vpop.f32.mrb[0].mxu0
        %v698 = vadd.f32 0.0, %v697
        %v699 = vpop.f32.mrb[0].mxu0
        %700 = vmatprep.mubr.f32.mxu0 0.0
        %701 = vmatmul.mubr.f32.gmra.mrb[0].mxu0 %v599
        %v702 = vpop.f32.mrb[0].mxu0
        %v703 = vadd.f32 0.0, %v702
        %v704 = vpop.f32.mrb[0].mxu0
        %705 = vdwg.mxu0
        %v706 = vmul.f32 %v281, %v281
        %v707 = vmul.f32 %v286, %v286
        %v708 = vmul.f32 %v291, %v291
        %v709 = vmul.f32 %v296, %v296
        %v710 = vmul.f32 %v301, %v301
        %v711 = vmul.f32 %v306, %v306
        %v712 = vmul.f32 %v311, %v311
        %v713 = vmul.f32 %v316, %v316
        %v714 = vmul.f32 %v410, %v410
        %v715 = vmul.f32 %v415, %v415
        %v716 = vmul.f32 %v420, %v420
        %v717 = vmul.f32 %v425, %v425
        %v718 = vmul.f32 %v430, %v430
        %v719 = vmul.f32 %v435, %v435
        %v720 = vmul.f32 %v440, %v440
        %v721 = vmul.f32 %v445, %v445
        %v722 = vmul.f32 %v539, %v539
        %v723 = vmul.f32 %v544, %v544
        %v724 = vmul.f32 %v549, %v549
        %v725 = vmul.f32 %v554, %v554
        %v726 = vmul.f32 %v559, %v559
        %v727 = vmul.f32 %v564, %v564
        %v728 = vmul.f32 %v569, %v569
        %v729 = vmul.f32 %v574, %v574
        %v730 = vmul.f32 %v668, %v668
        %v731 = vmul.f32 %v673, %v673
        %v732 = vmul.f32 %v678, %v678
        %v733 = vmul.f32 %v683, %v683
        %v734 = vmul.f32 %v688, %v688
        %v735 = vmul.f32 %v693, %v693
        %v736 = vmul.f32 %v698, %v698
        %v737 = vmul.f32 %v703, %v703
        %v738 = vsel %vm189, %v706, 0.0
        %v739 = vsel %vm189, %v707, 0.0
        %v740 = vadd.f32 %v738, %v739
        %v741 = vsel %vm189, %v708, 0.0
        %v742 = vadd.f32 %v740, %v741
        %v743 = vsel %vm189, %v709, 0.0
        %v744 = vadd.f32 %v742, %v743
        %v745 = vsel %vm189, %v710, 0.0
        %v746 = vadd.f32 %v744, %v745
        %v747 = vsel %vm189, %v711, 0.0
        %v748 = vadd.f32 %v746, %v747
        %v749 = vsel %vm189, %v712, 0.0
        %v750 = vadd.f32 %v748, %v749
        %v751 = vsel %vm189, %v713, 0.0
        %v752 = vadd.f32 %v750, %v751
        %v753 = vsel %vm189, %v714, 0.0
        %v754 = vadd.f32 %v752, %v753
        %v755 = vsel %vm189, %v715, 0.0
        %v756 = vadd.f32 %v754, %v755
        %v757 = vsel %vm189, %v716, 0.0
        %v758 = vadd.f32 %v756, %v757
        %v759 = vsel %vm189, %v717, 0.0
        %v760 = vadd.f32 %v758, %v759
        %v761 = vsel %vm189, %v718, 0.0
        %v762 = vadd.f32 %v760, %v761
        %v763 = vsel %vm189, %v719, 0.0
        %v764 = vadd.f32 %v762, %v763
        %v765 = vsel %vm189, %v720, 0.0
        %v766 = vadd.f32 %v764, %v765
        %v767 = vsel %vm189, %v721, 0.0
        %v768 = vadd.f32 %v766, %v767
        %v769 = vsel %vm189, %v722, 0.0
        %v770 = vadd.f32 %v768, %v769
        %v771 = vsel %vm189, %v723, 0.0
        %v772 = vadd.f32 %v770, %v771
        %v773 = vsel %vm189, %v724, 0.0
        %v774 = vadd.f32 %v772, %v773
        %v775 = vsel %vm189, %v725, 0.0
        %v776 = vadd.f32 %v774, %v775
        %v777 = vsel %vm189, %v726, 0.0
        %v778 = vadd.f32 %v776, %v777
        %v779 = vsel %vm189, %v727, 0.0
        %v780 = vadd.f32 %v778, %v779
        %v781 = vsel %vm189, %v728, 0.0
        %v782 = vadd.f32 %v780, %v781
        %v783 = vsel %vm189, %v729, 0.0
        %v784 = vadd.f32 %v782, %v783
        %v785 = vsel %vm189, %v730, 0.0
        %v786 = vadd.f32 %v784, %v785
        %v787 = vsel %vm189, %v731, 0.0
        %v788 = vadd.f32 %v786, %v787
        %v789 = vsel %vm189, %v732, 0.0
        %v790 = vadd.f32 %v788, %v789
        %v791 = vsel %vm189, %v733, 0.0
        %v792 = vadd.f32 %v790, %v791
        %v793 = vsel %vm189, %v734, 0.0
        %v794 = vadd.f32 %v792, %v793
        %v795 = vsel %vm189, %v735, 0.0
        %v796 = vadd.f32 %v794, %v795
        %v797 = vsel %vm189, %v736, 0.0
        %v798 = vadd.f32 %v796, %v797
        %v799 = vsel %vm189, %v737, 0.0
        %v800 = vadd.f32 %v798, %v799
        %801 = vadd.xlane.f32.xlu0 %v800
        %v802 = vpop.xlane.xlu0 %801
        %v803 = vrot.slane %v802, 4
        %v804 = vadd.f32 %v802, %v803
        %v805 = vrot.slane %v804, 2
        %v806 = vadd.f32 %v804, %v805
        %v807 = vrot.slane %v806, 1
        %v808 = vadd.f32 %v806, %v807
        %s809 = vtos %v808
        %v810 = vmul.f32 %v157, %v157
        %v811 = vmul.f32 %v158, %v158
        %v812 = vmul.f32 %v159, %v159
        %v813 = vmul.f32 %v160, %v160
        %v814 = vmul.f32 %v161, %v161
        %v815 = vmul.f32 %v162, %v162
        %v816 = vmul.f32 %v163, %v163
        %v817 = vmul.f32 %v164, %v164
        %v818 = vmul.f32 %v165, %v165
        %v819 = vmul.f32 %v166, %v166
        %v820 = vmul.f32 %v167, %v167
        %v821 = vmul.f32 %v168, %v168
        %v822 = vmul.f32 %v169, %v169
        %v823 = vmul.f32 %v170, %v170
        %v824 = vmul.f32 %v171, %v171
        %v825 = vmul.f32 %v172, %v172
        %v826 = vmul.f32 %v173, %v173
        %v827 = vmul.f32 %v174, %v174
        %v828 = vmul.f32 %v175, %v175
        %v829 = vmul.f32 %v176, %v176
        %v830 = vmul.f32 %v177, %v177
        %v831 = vmul.f32 %v178, %v178
        %v832 = vmul.f32 %v179, %v179
        %v833 = vmul.f32 %v180, %v180
        %v834 = vmul.f32 %v181, %v181
        %v835 = vmul.f32 %v182, %v182
        %v836 = vmul.f32 %v183, %v183
        %v837 = vmul.f32 %v184, %v184
        %v838 = vmul.f32 %v185, %v185
        %v839 = vmul.f32 %v186, %v186
        %v840 = vmul.f32 %v187, %v187
        %v841 = vmul.f32 %v188, %v188
        %v842 = vsel %vm189, %v810, 0.0
        %v843 = vsel %vm189, %v811, 0.0
        %v844 = vadd.f32 %v842, %v843
        %v845 = vsel %vm189, %v812, 0.0
        %v846 = vadd.f32 %v844, %v845
        %v847 = vsel %vm189, %v813, 0.0
        %v848 = vadd.f32 %v846, %v847
        %v849 = vsel %vm189, %v814, 0.0
        %v850 = vadd.f32 %v848, %v849
        %v851 = vsel %vm189, %v815, 0.0
        %v852 = vadd.f32 %v850, %v851
        %v853 = vsel %vm189, %v816, 0.0
        %v854 = vadd.f32 %v852, %v853
        %v855 = vsel %vm189, %v817, 0.0
        %v856 = vadd.f32 %v854, %v855
        %v857 = vsel %vm189, %v818, 0.0
        %v858 = vadd.f32 %v856, %v857
        %v859 = vsel %vm189, %v819, 0.0
        %v860 = vadd.f32 %v858, %v859
        %v861 = vsel %vm189, %v820, 0.0
        %v862 = vadd.f32 %v860, %v861
        %v863 = vsel %vm189, %v821, 0.0
        %v864 = vadd.f32 %v862, %v863
        %v865 = vsel %vm189, %v822, 0.0
        %v866 = vadd.f32 %v864, %v865
        %v867 = vsel %vm189, %v823, 0.0
        %v868 = vadd.f32 %v866, %v867
        %v869 = vsel %vm189, %v824, 0.0
        %v870 = vadd.f32 %v868, %v869
        %v871 = vsel %vm189, %v825, 0.0
        %v872 = vadd.f32 %v870, %v871
        %v873 = vsel %vm189, %v826, 0.0
        %v874 = vadd.f32 %v872, %v873
        %v875 = vsel %vm189, %v827, 0.0
        %v876 = vadd.f32 %v874, %v875
        %v877 = vsel %vm189, %v828, 0.0
        %v878 = vadd.f32 %v876, %v877
        %v879 = vsel %vm189, %v829, 0.0
        %v880 = vadd.f32 %v878, %v879
        %v881 = vsel %vm189, %v830, 0.0
        %v882 = vadd.f32 %v880, %v881
        %v883 = vsel %vm189, %v831, 0.0
        %v884 = vadd.f32 %v882, %v883
        %v885 = vsel %vm189, %v832, 0.0
        %v886 = vadd.f32 %v884, %v885
        %v887 = vsel %vm189, %v833, 0.0
        %v888 = vadd.f32 %v886, %v887
        %v889 = vsel %vm189, %v834, 0.0
        %v890 = vadd.f32 %v888, %v889
        %v891 = vsel %vm189, %v835, 0.0
        %v892 = vadd.f32 %v890, %v891
        %v893 = vsel %vm189, %v836, 0.0
        %v894 = vadd.f32 %v892, %v893
        %v895 = vsel %vm189, %v837, 0.0
        %v896 = vadd.f32 %v894, %v895
        %v897 = vsel %vm189, %v838, 0.0
        %v898 = vadd.f32 %v896, %v897
        %v899 = vsel %vm189, %v839, 0.0
        %v900 = vadd.f32 %v898, %v899
        %v901 = vsel %vm189, %v840, 0.0
        %v902 = vadd.f32 %v900, %v901
        %v903 = vsel %vm189, %v841, 0.0
        %v904 = vadd.f32 %v902, %v903
        %905 = vadd.xlane.f32.xlu0 %v904
        %v906 = vpop.xlane.xlu0 %905
        %v907 = vrot.slane %v906, 4
        %v908 = vadd.f32 %v906, %v907
        %v909 = vrot.slane %v908, 2
        %v910 = vadd.f32 %v908, %v909
        %v911 = vrot.slane %v910, 1
        %v912 = vadd.f32 %v910, %v911
        %s913 = vtos %v912
        %s914 = smul.f32 %s913, 2.0
        %s915 = ssub.f32 %s809, %s914
        %v916 = vld [vmem:[%s150] sm:$0x1]
        %v917 = vstv %s915
        %v918 = vadd.f32 %v916, %v917
        %vm919 = vcmask 0
        %920 = vst.msk [vmem:[%s150] sm:$0x1] %vm919, %v918
        %p921 = scmp.lt.s32.totalorder %s19, 1
        %s922 = scalar_select %p921, %s19, 1
        %s923 = scalar_lea.vmem %s1, %s922
        // Predicated region
        $region33: #{tpu_custom_call.1} parent=23 // pred_check
          %p924 = pneg %p73
        $region34: #{tpu_custom_call.1} parent=23 // pred_check_branch
          %926 = sbr.rel (%p924) target = $region36
        $region35: #{tpu_custom_call.1} parent=23 // pred_region
          _
        $region36: #{tpu_custom_call.1} parent=23 // pred_fallthru
          _
      $region24: #{tpu_custom_call.1} parent=5 // pred_fallthru
        _
      %p927 = scmp.le.s32.totalorder 2, %s10
      // Predicated region
      $region37: #{tpu_custom_call.1} parent=5 // pred_check
        %p928 = pneg %p927
      $region38: #{tpu_custom_call.1} parent=5 // pred_check_branch
        %930 = sbr.rel (%p928) target = $region40
      $region39: #{tpu_custom_call.1} parent=5 // pred_region
        %s931 = ssub.s32 %s10, 2
        // Predicated region
        $region41: #{tpu_custom_call.1} parent=39 // pred_check
          %p932 = pneg %p79
        $region42: #{tpu_custom_call.1} parent=39 // pred_check_branch
          %934 = sbr.rel (%p932) target = $region44
        $region43: #{tpu_custom_call.1} parent=39 // pred_region
          %p935 = scmp.lt.s32.totalorder %s21, 1
          %s936 = scalar_select %p935, %s21, 1
          %s937 = scalar_lea.vmem %s1, %s936
        $region44: #{tpu_custom_call.1} parent=39 // pred_fallthru
          _
      $region40: #{tpu_custom_call.1} parent=5 // pred_fallthru
        _
    $region6: #{tpu_custom_call.1} parent=1 // loop_footer
      %s14 = sadd.s32 1, %s10
    $region7: #{tpu_custom_call.1} parent=1 // loop_footer_branch
      %9 = sbr.rel target = $region3
    $region8: #{tpu_custom_call.1} parent=1 // loop_exit
      _
    %938 = vsyncpa [#allocation3], 1
    %s939 = scalar_lea.sflag [#allocation3], 1
    %940 = vsyncpa %s939, 1

</llo_original>
